<compile_context>
chip_gen: v7x
topology: tpu7x:2x2x1
jax: 0.10.0
libtpu: 0.0.40
codegen_flags: <defaults>
</compile_context>

<pallas_src>
import jax
import jax.numpy as jnp
import numpy as np
from jax import lax
from jax.experimental import pallas as pl
from jax.experimental.pallas import tpu as pltpu


def make_mlp_kernel(F, H1, H2, O):
    """Build the fused 3-layer MLP kernel with static layer sizes."""

    def mlp_kernel(x_ref, w_ref, b_ref, o_ref):
        # x_ref: (tile_b, F) f32    -- raw input tile, cast to bf16 on the VPU
        # w_ref: (3, S0, S1) bf16   -- [w1; w2; w3] zero-padded to a common shape
        # b_ref: (3, S0, 1) f32     -- [b1; b2; b3] zero-padded, column vectors
        # o_ref: (O, tile_b) f32    -- lane-dense output row(s)
        x = x_ref[...].astype(jnp.bfloat16)                      # (tile_b, F)

        w1 = w_ref[0][:H1, :F]                                   # (H1, F)
        w2 = w_ref[1][:H2, :H1]                                  # (H2, H1)
        w3 = w_ref[2][:O, :H2]                                   # (O, H2)
        b1 = b_ref[0][:H1, :]                                    # (H1, 1)
        b2 = b_ref[1][:H2, :]
        b3 = b_ref[2][:O, :]

        # Layer 1: h[h, b] = sum_f W1[h, f] * x[b, f]  ->  (H1, tile_b).
        # Contract both operands on their last dim (A @ B^T, MXU-native).
        h = lax.dot_general(w1, x, (((1,), (1,)), ((), ())),
                            preferred_element_type=jnp.float32)
        h = jnp.maximum(h + b1, 0.0)                             # f32 epilogue

        # Layer 2: (H2, H1) @ (H1, tile_b) -> (H2, tile_b)
        h = jnp.dot(w2, h.astype(jnp.bfloat16),
                    preferred_element_type=jnp.float32)
        h = jnp.maximum(h + b2, 0.0)
        # Dropout (p=0.3) is identity at inference time.

        # Layer 3: (O, H2) @ (H2, tile_b) -> (O, tile_b): lane-dense store.
        o = jnp.dot(w3, h.astype(jnp.bfloat16),
                    preferred_element_type=jnp.float32)
        o_ref[...] = o + b3

    return mlp_kernel


def _choose_tile_b(B, max_tile_b):
    """Batch tile: multiple of 128 (lane-dense output blocks), capped at
    max_tile_b, and sized so the grid has >= 2 steps whenever B allows it
    (v7x megacore: the 'parallel' batch axis shards across both TensorCores)."""
    if B <= 128:
        return 128
    half = -(-B // 2)                    # ceil(B / 2)
    tile = -(-half // 128) * 128         # round up to a lane multiple
    return int(min(max_tile_b, tile))


def mlp_forward(x, params, *, max_tile_b=2048):
    """x: [B, F] float32. params: PyTorch-layout weights w{i}:[out,in], b{i}:[out]."""
    B, F = x.shape
    w1, b1 = params["w1"], params["b1"]
    w2, b2 = params["w2"], params["b2"]
    w3, b3 = params["w3"], params["b3"]
    H1, H2, O = w1.shape[0], w2.shape[0], w3.shape[0]

    tile_b = _choose_tile_b(B, max_tile_b)
    num_tiles = pl.cdiv(B, tile_b)

    # Pack the six tiny weight/bias operands into two resident slabs (one-time
    # cost of a few KiB; in real use these would be precomputed once).
    S0 = max(H1, H2, O)
    S1 = max(F, H1, H2)

    def pad_w(w):
        return jnp.pad(w, ((0, S0 - w.shape[0]), (0, S1 - w.shape[1])))

    def pad_b(b):
        return jnp.pad(b.reshape(-1, 1), ((0, S0 - b.shape[0]), (0, 0)))

    w_stack = jnp.stack([pad_w(w1), pad_w(w2), pad_w(w3)]).astype(jnp.bfloat16)
    b_stack = jnp.stack([pad_b(b1), pad_b(b2), pad_b(b3)]).astype(jnp.float32)

    kernel = make_mlp_kernel(F, H1, H2, O)
    const = lambda i: (0, 0, 0)   # slabs: same (resident) block every grid step

    out_t = pl.pallas_call(
        kernel,
        out_shape=jax.ShapeDtypeStruct((O, B), jnp.float32),
        grid_spec=pltpu.PrefetchScalarGridSpec(
            num_scalar_prefetch=0,
            grid=(num_tiles,),
            in_specs=[
                # x streamed straight from HBM as f32; ragged last block OK.
                pl.BlockSpec((tile_b, F), lambda i: (i, 0)),
                pl.BlockSpec((3, S0, S1), const),   # weight slab (bf16)
                pl.BlockSpec((3, S0, 1), const),    # bias slab (f32)
            ],
            # Lane-dense output: (O, tile_b) row blocks along the lane axis;
            # the partial last block is a masked store.
            out_specs=pl.BlockSpec((O, tile_b), lambda i: (0, i)),
        ),
        compiler_params=pltpu.CompilerParams(
            dimension_semantics=("parallel",),   # batch axis shards across TCs
        ),
    )(x, w_stack, b_stack)

    # (O, B) -> (B, O)
    return out_t.T


def init_params(key, in_features, hidden_sizes, out_size):
    """Deterministic init, PyTorch nn.Linear layout: w [out, in], b [out]."""
    sizes = [in_features] + list(hidden_sizes) + [out_size]
    params = {}
    ks = jax.random.split(key, len(sizes) - 1)
    for idx, (fin, fout) in enumerate(zip(sizes[:-1], sizes[1:]), start=1):
        bound = 1.0 / np.sqrt(fin)  # nn.Linear default-ish uniform scale
        wk, bk = jax.random.split(ks[idx - 1])
        params[f"w{idx}"] = jax.random.uniform(
            wk, (fout, fin), jnp.float32, -bound, bound)
        params[f"b{idx}"] = jax.random.uniform(
            bk, (fout,), jnp.float32, -bound, bound)
    return params


def mlp_reference(x, params):
    """Pure-JAX reference mirroring the kernel's bf16-input / f32-accum numerics."""
    bf, f32 = jnp.bfloat16, jnp.float32
    w1 = params["w1"].astype(bf)
    w2 = params["w2"].astype(bf)
    w3 = params["w3"].astype(bf)
    h = jnp.dot(x.astype(bf), w1.T, preferred_element_type=f32) + params["b1"]
    h = jnp.maximum(h, 0.0)
    h = jnp.dot(h.astype(bf), w2.T, preferred_element_type=f32) + params["b2"]
    h = jnp.maximum(h, 0.0)
    return jnp.dot(h.astype(bf), w3.T, preferred_element_type=f32) + params["b3"]


if __name__ == "__main__":
    key = jax.random.PRNGKey(0)
    kx, kp = jax.random.split(key)

    # Module-consistent shapes: 32 input features, hidden_sizes=[32, 32],
    # regression head -> out_size=1.  B=1000 exercises the ragged last block
    # (tile_b auto-picks 512 -> 2 grid steps, one per v7x TensorCore).
    B, F = 1000, 32
    hidden_sizes = [32, 32]
    out_size = 1  # mode='regression'

    x = jax.random.normal(kx, (B, F), dtype=jnp.float32)
    params = init_params(kp, F, hidden_sizes, out_size)

    y = mlp_forward(x, params)
    y = jax.block_until_ready(y)
    assert y.shape == (B, out_size)

    y_ref = mlp_reference(x, params)
    np.testing.assert_allclose(np.asarray(y), np.asarray(y_ref),
                               rtol=5e-3, atol=5e-3)
    print("KERNEL_OK")
</pallas_src>

<mosaic_0001>
module attributes {stable_mosaic.version = 11 : i64} {
  func.func @mlp_kernel(%arg0: i32, %arg1: memref<512x32xf32, #tpu.memory_space<vmem>>, %arg2: memref<3x32x32xbf16, #tpu.memory_space<vmem>>, %arg3: memref<3x32x1xf32, #tpu.memory_space<vmem>>, %arg4: memref<1x512xf32, #tpu.memory_space<vmem>>) attributes {dimension_semantics = [#tpu.dimension_semantics<parallel>], iteration_bounds = array<i64: 2>, scalar_prefetch = 0 : i64, scratch_operands = 0 : i64, tpu.core_type = #tpu.core_type<tc>, window_params = [{transform_indices = @transform_0, window_bounds = array<i64: 512, 32>}, {pipeline_mode = #tpu.pipeline_mode<synchronous>, transform_indices = @transform_1, window_bounds = array<i64: 3, 32, 32>}, {pipeline_mode = #tpu.pipeline_mode<synchronous>, transform_indices = @transform_2, window_bounds = array<i64: 3, 32, 1>}, {transform_indices = @transform_3, window_bounds = array<i64: 1, 512>}]} {
    %c0 = arith.constant 0 : index
    %c0_0 = arith.constant 0 : index
    %0 = vector.load %arg1[%c0, %c0_0] : memref<512x32xf32, #tpu.memory_space<vmem>>, vector<512x32xf32>
    %1 = arith.truncf %0 : vector<512x32xf32> to vector<512x32xbf16>
    %c0_1 = arith.constant 0 : index
    %c0_2 = arith.constant 0 : index
    %c0_3 = arith.constant 0 : index
    %2 = vector.load %arg2[%c0_1, %c0_2, %c0_3] : memref<3x32x32xbf16, #tpu.memory_space<vmem>>, vector<1x32x32xbf16>
    %3 = vector.shape_cast %2 : vector<1x32x32xbf16> to vector<32x32xbf16>
    %c1 = arith.constant 1 : index
    %c0_4 = arith.constant 0 : index
    %c0_5 = arith.constant 0 : index
    %4 = vector.load %arg2[%c1, %c0_4, %c0_5] : memref<3x32x32xbf16, #tpu.memory_space<vmem>>, vector<1x32x32xbf16>
    %5 = vector.shape_cast %4 : vector<1x32x32xbf16> to vector<32x32xbf16>
    %c2 = arith.constant 2 : index
    %c0_6 = arith.constant 0 : index
    %c0_7 = arith.constant 0 : index
    %6 = vector.load %arg2[%c2, %c0_6, %c0_7] : memref<3x32x32xbf16, #tpu.memory_space<vmem>>, vector<1x32x32xbf16>
    %7 = vector.shape_cast %6 : vector<1x32x32xbf16> to vector<32x32xbf16>
    %8 = vector.extract_strided_slice %7 {offsets = [0, 0], sizes = [1, 32], strides = [1, 1]} : vector<32x32xbf16> to vector<1x32xbf16>
    %c0_8 = arith.constant 0 : index
    %c0_9 = arith.constant 0 : index
    %c0_10 = arith.constant 0 : index
    %9 = vector.load %arg3[%c0_8, %c0_9, %c0_10] : memref<3x32x1xf32, #tpu.memory_space<vmem>>, vector<1x32x1xf32>
    %10 = vector.shape_cast %9 : vector<1x32x1xf32> to vector<32x1xf32>
    %c1_11 = arith.constant 1 : index
    %c0_12 = arith.constant 0 : index
    %c0_13 = arith.constant 0 : index
    %11 = vector.load %arg3[%c1_11, %c0_12, %c0_13] : memref<3x32x1xf32, #tpu.memory_space<vmem>>, vector<1x32x1xf32>
    %12 = vector.shape_cast %11 : vector<1x32x1xf32> to vector<32x1xf32>
    %c2_14 = arith.constant 2 : index
    %c0_15 = arith.constant 0 : index
    %c0_16 = arith.constant 0 : index
    %13 = vector.load %arg3[%c2_14, %c0_15, %c0_16] : memref<3x32x1xf32, #tpu.memory_space<vmem>>, vector<1x32x1xf32>
    %14 = vector.shape_cast %13 : vector<1x32x1xf32> to vector<32x1xf32>
    %15 = vector.extract_strided_slice %14 {offsets = [0, 0], sizes = [1, 1], strides = [1, 1]} : vector<32x1xf32> to vector<1x1xf32>
    %cst = arith.constant dense<0.000000e+00> : vector<32x512xf32>
    %16 = tpu.matmul %3, %1, %cst {dimension_numbers = #tpu.dot_dimension_numbers<[1], [1], [0], [0], [0, 0, 1, 0], [], []>} : vector<32x32xbf16>, vector<512x32xbf16>, vector<32x512xf32> -> vector<32x512xf32>
    %17 = vector.broadcast %10 : vector<32x1xf32> to vector<32x512xf32>
    %18 = arith.addf %16, %17 : vector<32x512xf32>
    %cst_17 = arith.constant 0.000000e+00 : f32
    %19 = vector.broadcast %cst_17 : f32 to vector<32x512xf32>
    %20 = arith.maximumf %18, %19 : vector<32x512xf32>
    %21 = arith.truncf %20 : vector<32x512xf32> to vector<32x512xbf16>
    %cst_18 = arith.constant dense<0.000000e+00> : vector<32x512xf32>
    %22 = tpu.matmul %5, %21, %cst_18 {dimension_numbers = #tpu.dot_dimension_numbers<[1], [0], [0], [1], [0, 0, 1, 1], [], []>} : vector<32x32xbf16>, vector<32x512xbf16>, vector<32x512xf32> -> vector<32x512xf32>
    %23 = vector.broadcast %12 : vector<32x1xf32> to vector<32x512xf32>
    %24 = arith.addf %22, %23 : vector<32x512xf32>
    %cst_19 = arith.constant 0.000000e+00 : f32
    %25 = vector.broadcast %cst_19 : f32 to vector<32x512xf32>
    %26 = arith.maximumf %24, %25 : vector<32x512xf32>
    %27 = arith.truncf %26 : vector<32x512xf32> to vector<32x512xbf16>
    %cst_20 = arith.constant dense<0.000000e+00> : vector<1x512xf32>
    %28 = tpu.matmul %8, %27, %cst_20 {dimension_numbers = #tpu.dot_dimension_numbers<[1], [0], [0], [1], [0, 0, 1, 1], [], []>} : vector<1x32xbf16>, vector<32x512xbf16>, vector<1x512xf32> -> vector<1x512xf32>
    %29 = vector.broadcast %15 : vector<1x1xf32> to vector<1x512xf32>
    %30 = arith.addf %28, %29 : vector<1x512xf32>
    %c0_21 = arith.constant 0 : index
    %c0_22 = arith.constant 0 : index
    %31 = vector.load %arg4[%c0_21, %c0_22] : memref<1x512xf32, #tpu.memory_space<vmem>>, vector<1x512xf32>
    tpu.vector_store %arg4[%c0_21, %c0_22], %30 {strides = array<i32>} : memref<1x512xf32, #tpu.memory_space<vmem>>, vector<1x512xf32>,
    return
  }
  func.func @transform_0(%arg0: i32) -> (i32, i32) {
    %c0_i32 = arith.constant 0 : i32
    %c0_i32_0 = arith.constant 0 : i32
    return %arg0, %c0_i32 : i32, i32
  }
  func.func @transform_1(%arg0: i32) -> (i32, i32, i32) {
    %c0_i32 = arith.constant 0 : i32
    %c0_i32_0 = arith.constant 0 : i32
    %c0_i32_1 = arith.constant 0 : i32
    %c0_i32_2 = arith.constant 0 : i32
    return %c0_i32, %c0_i32_0, %c0_i32_1 : i32, i32, i32
  }
  func.func @transform_2(%arg0: i32) -> (i32, i32, i32) {
    %c0_i32 = arith.constant 0 : i32
    %c0_i32_0 = arith.constant 0 : i32
    %c0_i32_1 = arith.constant 0 : i32
    %c0_i32_2 = arith.constant 0 : i32
    return %c0_i32, %c0_i32_0, %c0_i32_1 : i32, i32, i32
  }
  func.func @transform_3(%arg0: i32) -> (i32, i32) {
    %c0_i32 = arith.constant 0 : i32
    %c0_i32_0 = arith.constant 0 : i32
    return %c0_i32, %arg0 : i32, i32
  }
}

</mosaic_0001>

<llo_original>
// kernel: tpu_custom_call.1
$region0: #{tpu_custom_call.1}
  #allocation0 [shape = 'u32[]', space=smem, size = 0x4, offset = 0x4, fixed_abs, tag = 'smem constant byte address 0x4 - core index']
  #allocation1 [shape = 'u32[144,128]{1,0:T(1,128)}', space=vmem, size = 0x12000, scoped, tag = 'internal scratch']
  %s0 = inlined_call_operand.vmem [shape: f32[1000,32], index: 0, kind: input, shape index: {}]
  %s1 = inlined_call_operand.vmem [shape: bf16[3,32,32], index: 1, kind: input, shape index: {}]
  %s2 = inlined_call_operand.vmem [shape: f32[3,32,1], index: 2, kind: input, shape index: {}]
  %s3 = inlined_call_operand.hbm [shape: f32[1,1000], index: 3, kind: output, shape index: {}]
  %s4 = sld [smem:[#allocation0]]
  $region45: #{tpu_custom_call.1} parent=0
    _
  %s6 = ssub.s32 1, %s4
  %s7 = scalar_select 0, %s6, %s4
  $region1: #{tpu_custom_call.1} parent=0
    #allocation2 [shape = 'u8[4096]{0}', space=vmem, size = 0x1000, scoped, tag = 'output window, operand 0']
    #allocation3 [shape = 's32[2]{0}', space=sflag, size = 0x8, scoped, tag = 'scoped memory for tpu_custom_call.1']
    %8 = vsyncpa [#allocation3], 0
    %s9 = scalar_lea.sflag [#allocation3], 1
    %10 = vsyncpa %s9, 0
    loop: start=0, step=1, limit=4
    $region2: #{tpu_custom_call.1} parent=1 // loop_pre_header
      _
    $region3: #{tpu_custom_call.1} parent=1 // loop_header
      %s12 = sphi 0, %s16
      %p13 = scmp.ge.s32.totalorder %s12, 4
      %s22 = sphi 0, %s24
      %s25 = sphi 0, %s22
      %s26 = sphi 0, %s25
      %s42 = sphi 0, %s26
      %s46 = sphi 0, %s46
      %s48 = sphi 0, %s46
      %s49 = sphi 0, %s48
      %s63 = sphi 0, %s49
      %s67 = sphi 0, %s67
      %s69 = sphi 0, %s67
      %s70 = sphi 0, %s69
      %s84 = sphi 0, %s70
      %s90 = sphi 0, %s92
      %s93 = sphi 0, %s90
      %s94 = sphi 0, %s93
      %s110 = sphi 0, %s94
    $region4: #{tpu_custom_call.1} parent=1 // loop_header_branch
      %15 = sbr.rel (%p13) target = $region8
    $region5: #{tpu_custom_call.1} parent=1 // loop_body
      %s17 = ssub.s32 %s12, 1
      %s18 = ssub.s32 %s12, 2
      %s19 = sadd.s32 %s12, 1
      %s20 = ssub.s32 %s12, %s19
      %p21 = scmp.eq.s32.totalorder %s20, 0
      %s23 = sadd.s32 %s22, 1
      %s24 = scalar_select %p21, %s22, %s23
      %p27 = pneg %p21
      %p28 = scmp.eq.s32.totalorder %s12, 1
      %p29 = por %p27, %p28
      %p30 = scmp.ne.s32.totalorder %s22, %s25
      %p31 = scmp.eq.s32.totalorder %s12, 0
      %p32 = por %p30, %p31
      %p33 = scmp.ne.s32.totalorder %s22, %s25
      %p34 = scmp.eq.s32.totalorder %s17, 1
      %p35 = por %p33, %p34
      %p36 = scmp.ne.s32.totalorder %s25, %s26
      %p37 = scmp.eq.s32.totalorder %s17, 0
      %p38 = por %p36, %p37
      %p39 = scmp.ne.s32.totalorder %s25, %s26
      %p40 = scmp.eq.s32.totalorder %s18, 1
      %p41 = por %p39, %p40
      %p43 = scmp.ne.s32.totalorder %s26, %s42
      %p44 = scmp.eq.s32.totalorder %s18, 0
      %p45 = por %p43, %p44
      %s47 = sadd.s32 %s46, 1
      %p50 = scmp.eq.s32.totalorder %s12, 1
      %p51 = scmp.ne.s32.totalorder %s46, %s48
      %p52 = scmp.eq.s32.totalorder %s12, 0
      %p53 = por %p51, %p52
      %p54 = scmp.ne.s32.totalorder %s46, %s48
      %p55 = scmp.eq.s32.totalorder %s17, 1
      %p56 = por %p54, %p55
      %p57 = scmp.ne.s32.totalorder %s48, %s49
      %p58 = scmp.eq.s32.totalorder %s17, 0
      %p59 = por %p57, %p58
      %p60 = scmp.ne.s32.totalorder %s48, %s49
      %p61 = scmp.eq.s32.totalorder %s18, 1
      %p62 = por %p60, %p61
      %p64 = scmp.ne.s32.totalorder %s49, %s63
      %p65 = scmp.eq.s32.totalorder %s18, 0
      %p66 = por %p64, %p65
      %s68 = sadd.s32 %s67, 1
      %p71 = scmp.eq.s32.totalorder %s12, 1
      %p72 = scmp.ne.s32.totalorder %s67, %s69
      %p73 = scmp.eq.s32.totalorder %s12, 0
      %p74 = por %p72, %p73
      %p75 = scmp.ne.s32.totalorder %s67, %s69
      %p76 = scmp.eq.s32.totalorder %s17, 1
      %p77 = por %p75, %p76
      %p78 = scmp.ne.s32.totalorder %s69, %s70
      %p79 = scmp.eq.s32.totalorder %s17, 0
      %p80 = por %p78, %p79
      %p81 = scmp.ne.s32.totalorder %s69, %s70
      %p82 = scmp.eq.s32.totalorder %s18, 1
      %p83 = por %p81, %p82
      %p85 = scmp.ne.s32.totalorder %s70, %s84
      %p86 = scmp.eq.s32.totalorder %s18, 0
      %p87 = por %p85, %p86
      %s88 = ssub.s32 %s12, %s19
      %p89 = scmp.eq.s32.totalorder %s88, 0
      %s91 = sadd.s32 %s90, 1
      %s92 = scalar_select %p89, %s90, %s91
      %p95 = pneg %p89
      %p96 = scmp.eq.s32.totalorder %s12, 1
      %p97 = por %p95, %p96
      %p98 = scmp.ne.s32.totalorder %s90, %s93
      %p99 = scmp.eq.s32.totalorder %s12, 0
      %p100 = por %p98, %p99
      %p101 = scmp.ne.s32.totalorder %s90, %s93
      %p102 = scmp.eq.s32.totalorder %s17, 1
      %p103 = por %p101, %p102
      %p104 = scmp.ne.s32.totalorder %s93, %s94
      %p105 = scmp.eq.s32.totalorder %s17, 0
      %p106 = por %p104, %p105
      %p107 = scmp.ne.s32.totalorder %s93, %s94
      %p108 = scmp.eq.s32.totalorder %s18, 1
      %p109 = por %p107, %p108
      %p111 = scmp.ne.s32.totalorder %s94, %s110
      %p112 = scmp.eq.s32.totalorder %s18, 0
      %p113 = por %p111, %p112
      %p114 = scmp.le.s32.totalorder 1, %s12
      %p115 = scmp.lt.s32.totalorder %s12, 3
      %p116 = pnand %p114, %p115
      %p117 = pneg %p116
      // Predicated region
      $region9: #{tpu_custom_call.1} parent=5 // pred_check
        _
      $region10: #{tpu_custom_call.1} parent=5 // pred_check_branch
        %119 = sbr.rel (%p116) target = $region12
      $region11: #{tpu_custom_call.1} parent=5 // pred_region
        %s120 = ssub.s32 %s12, 1
        // Predicated region
        $region13: #{tpu_custom_call.1} parent=11 // pred_check
          %p121 = pneg %p59
        $region14: #{tpu_custom_call.1} parent=11 // pred_check_branch
          %123 = sbr.rel (%p121) target = $region16
        $region15: #{tpu_custom_call.1} parent=11 // pred_region
          _
        $region16: #{tpu_custom_call.1} parent=11 // pred_fallthru
          _
        // Predicated region
        $region17: #{tpu_custom_call.1} parent=11 // pred_check
          %p124 = pneg %p80
        $region18: #{tpu_custom_call.1} parent=11 // pred_check_branch
          %126 = sbr.rel (%p124) target = $region20
        $region19: #{tpu_custom_call.1} parent=11 // pred_region
          _
        $region20: #{tpu_custom_call.1} parent=11 // pred_fallthru
          _
      $region12: #{tpu_custom_call.1} parent=5 // pred_fallthru
        _
      %p127 = scmp.lt.s32.totalorder %s12, 2
      // Predicated region
      $region21: #{tpu_custom_call.1} parent=5 // pred_check
        %p128 = pneg %p127
      $region22: #{tpu_custom_call.1} parent=5 // pred_check_branch
        %130 = sbr.rel (%p128) target = $region24
      $region23: #{tpu_custom_call.1} parent=5 // pred_region
        // Predicated region
        $region25: #{tpu_custom_call.1} parent=23 // pred_check
          %p131 = pneg %p32
        $region26: #{tpu_custom_call.1} parent=23 // pred_check_branch
          %133 = sbr.rel (%p131) target = $region28
        $region27: #{tpu_custom_call.1} parent=23 // pred_region
          %s134 = smul.u32 64, %s12
          %s135 = ssub.s32 125, %s134
          %p136 = scmp.lt.s32.totalorder %s135, 64
          %s137 = scalar_select %p136, %s135, 64
          %s138 = smul.u32 128, %s137
          %p139 = scmp.lt.s32.totalorder %s134, 124
          %s140 = scalar_select %p139, %s134, 124
          %s141 = smul.addr %s140, 8
          %s142 = scalar_lea.vmem %s0, %s141
          %s143 = smul.u32 64, %s12
          %s144 = ssub.s32 125, %s143
          %p145 = scmp.lt.s32.totalorder %s144, 64
          %s146 = scalar_select %p145, %s144, 64
          %s147 = smul.u32 128, %s146
        $region28: #{tpu_custom_call.1} parent=23 // pred_fallthru
          _
      $region24: #{tpu_custom_call.1} parent=5 // pred_fallthru
        _
      %p148 = scmp.le.s32.totalorder 1, %s12
      %p149 = scmp.lt.s32.totalorder %s12, 3
      %p150 = pnand %p148, %p149
      %p151 = pneg %p150
      // Predicated region
      $region29: #{tpu_custom_call.1} parent=5 // pred_check
        _
      $region30: #{tpu_custom_call.1} parent=5 // pred_check_branch
        %153 = sbr.rel (%p150) target = $region32
      $region31: #{tpu_custom_call.1} parent=5 // pred_region
        %s154 = ssub.s32 %s12, 1
        %s155 = smul.u32 64, %s17
        %s156 = ssub.s32 125, %s155
        %p157 = scmp.lt.s32.totalorder %s156, 64
        %s158 = scalar_select %p157, %s156, 64
        %s159 = smul.u32 128, %s158
        %p160 = scmp.lt.s32.totalorder %s155, 124
        %s161 = scalar_select %p160, %s155, 124
        %s162 = smul.addr %s161, 8
        %s163 = scalar_lea.vmem %s0, %s162
        %p164 = pneg %p38
        %p165 = pneg %p35
        %p166 = pneg %p59
        %p167 = pneg %p56
        %p168 = pneg %p80
        %p169 = pneg %p77
        %p170 = pneg %p106
        %p171 = pneg %p103
        %s172 = sand.u32 %s93, 1
        %s173 = scalar_lea.sflag [#allocation3], %s172
        %s174 = sand.u32 %s93, 1
        %s175 = smul.addr %s174, 4
        %s176 = scalar_lea.vmem [#allocation2], %s175
        %s177 = smul.u32 64, %s17
        %s178 = ssub.s32 125, %s177
        %p179 = scmp.lt.s32.totalorder %s178, 64
        %s180 = scalar_select %p179, %s178, 64
        %s181 = smul.u32 128, %s180
        %p182 = scmp.lt.s32.totalorder %s177, 124
        %s183 = scalar_select %p182, %s177, 124
        %s184 = smul.addr %s183, 8
        %s185 = scalar_lea.vmem %s0, %s184
        %s186 = smul.u32 64, %s17
        %s187 = ssub.s32 125, %s186
        %p188 = scmp.lt.s32.totalorder %s187, 64
        %s189 = scalar_select %p188, %s187, 64
        %s190 = smul.u32 128, %s189
        %s191 = smul.u32 4, %s17
        %v193 = vld [vmem:[%s185] sm:$0xff]
        %v194 = vld [vmem:[%s185 + $0x8] sm:$0xff]
        %v195 = vld [vmem:[%s185 + $0x10] sm:$0xff]
        %v196 = vld [vmem:[%s185 + $0x18] sm:$0xff]
        %v197 = vld [vmem:[%s185 + $0x20] sm:$0xff]
        %v198 = vld [vmem:[%s185 + $0x28] sm:$0xff]
        %v199 = vld [vmem:[%s185 + $0x30] sm:$0xff]
        %v200 = vld [vmem:[%s185 + $0x38] sm:$0xff]
        %v201 = vld [vmem:[%s185 + $0x40] sm:$0xff]
        %v202 = vld [vmem:[%s185 + $0x48] sm:$0xff]
        %v203 = vld [vmem:[%s185 + $0x50] sm:$0xff]
        %v204 = vld [vmem:[%s185 + $0x58] sm:$0xff]
        %v205 = vld [vmem:[%s185 + $0x60] sm:$0xff]
        %v206 = vld [vmem:[%s185 + $0x68] sm:$0xff]
        %v207 = vld [vmem:[%s185 + $0x70] sm:$0xff]
        %v208 = vld [vmem:[%s185 + $0x78] sm:$0xff]
        %v209 = vld [vmem:[%s185 + $0x80] sm:$0xff]
        %v210 = vld [vmem:[%s185 + $0x88] sm:$0xff]
        %v211 = vld [vmem:[%s185 + $0x90] sm:$0xff]
        %v212 = vld [vmem:[%s185 + $0x98] sm:$0xff]
        %v213 = vld [vmem:[%s185 + $0xa0] sm:$0xff]
        %v214 = vld [vmem:[%s185 + $0xa8] sm:$0xff]
        %v215 = vld [vmem:[%s185 + $0xb0] sm:$0xff]
        %v216 = vld [vmem:[%s185 + $0xb8] sm:$0xff]
        %v217 = vld [vmem:[%s185 + $0xc0] sm:$0xff]
        %v218 = vld [vmem:[%s185 + $0xc8] sm:$0xff]
        %v219 = vld [vmem:[%s185 + $0xd0] sm:$0xff]
        %v220 = vld [vmem:[%s185 + $0xd8] sm:$0xff]
        %v221 = vld [vmem:[%s185 + $0xe0] sm:$0xff]
        %v222 = vld [vmem:[%s185 + $0xe8] sm:$0xff]
        %v223 = vld [vmem:[%s185 + $0xf0] sm:$0xff]
        %v224 = vld [vmem:[%s185 + $0xf8] sm:$0xff]
        %v225 = vld [vmem:[%s185 + $0x100] sm:$0xff]
        %v226 = vld [vmem:[%s185 + $0x108] sm:$0xff]
        %v227 = vld [vmem:[%s185 + $0x110] sm:$0xff]
        %v228 = vld [vmem:[%s185 + $0x118] sm:$0xff]
        %v229 = vld [vmem:[%s185 + $0x120] sm:$0xff]
        %v230 = vld [vmem:[%s185 + $0x128] sm:$0xff]
        %v231 = vld [vmem:[%s185 + $0x130] sm:$0xff]
        %v232 = vld [vmem:[%s185 + $0x138] sm:$0xff]
        %v233 = vld [vmem:[%s185 + $0x140] sm:$0xff]
        %v234 = vld [vmem:[%s185 + $0x148] sm:$0xff]
        %v235 = vld [vmem:[%s185 + $0x150] sm:$0xff]
        %v236 = vld [vmem:[%s185 + $0x158] sm:$0xff]
        %v237 = vld [vmem:[%s185 + $0x160] sm:$0xff]
        %v238 = vld [vmem:[%s185 + $0x168] sm:$0xff]
        %v239 = vld [vmem:[%s185 + $0x170] sm:$0xff]
        %v240 = vld [vmem:[%s185 + $0x178] sm:$0xff]
        %v241 = vld [vmem:[%s185 + $0x180] sm:$0xff]
        %v242 = vld [vmem:[%s185 + $0x188] sm:$0xff]
        %v243 = vld [vmem:[%s185 + $0x190] sm:$0xff]
        %v244 = vld [vmem:[%s185 + $0x198] sm:$0xff]
        %v245 = vld [vmem:[%s185 + $0x1a0] sm:$0xff]
        %v246 = vld [vmem:[%s185 + $0x1a8] sm:$0xff]
        %v247 = vld [vmem:[%s185 + $0x1b0] sm:$0xff]
        %v248 = vld [vmem:[%s185 + $0x1b8] sm:$0xff]
        %v249 = vld [vmem:[%s185 + $0x1c0] sm:$0xff]
        %v250 = vld [vmem:[%s185 + $0x1c8] sm:$0xff]
        %v251 = vld [vmem:[%s185 + $0x1d0] sm:$0xff]
        %v252 = vld [vmem:[%s185 + $0x1d8] sm:$0xff]
        %v253 = vld [vmem:[%s185 + $0x1e0] sm:$0xff]
        %v254 = vld [vmem:[%s185 + $0x1e8] sm:$0xff]
        %v255 = vld [vmem:[%s185 + $0x1f0] sm:$0xff]
        %v256 = vld [vmem:[%s185 + $0x1f8] sm:$0xff]
        %v257 = vpack.c.bf16 %v194, %v193
        %v258 = vpack.c.bf16 %v196, %v195
        %v259 = vpack.c.bf16 %v198, %v197
        %v260 = vpack.c.bf16 %v200, %v199
        %v261 = vpack.c.bf16 %v202, %v201
        %v262 = vpack.c.bf16 %v204, %v203
        %v263 = vpack.c.bf16 %v206, %v205
        %v264 = vpack.c.bf16 %v208, %v207
        %v265 = vpack.c.bf16 %v210, %v209
        %v266 = vpack.c.bf16 %v212, %v211
        %v267 = vpack.c.bf16 %v214, %v213
        %v268 = vpack.c.bf16 %v216, %v215
        %v269 = vpack.c.bf16 %v218, %v217
        %v270 = vpack.c.bf16 %v220, %v219
        %v271 = vpack.c.bf16 %v222, %v221
        %v272 = vpack.c.bf16 %v224, %v223
        %v273 = vpack.c.bf16 %v226, %v225
        %v274 = vpack.c.bf16 %v228, %v227
        %v275 = vpack.c.bf16 %v230, %v229
        %v276 = vpack.c.bf16 %v232, %v231
        %v277 = vpack.c.bf16 %v234, %v233
        %v278 = vpack.c.bf16 %v236, %v235
        %v279 = vpack.c.bf16 %v238, %v237
        %v280 = vpack.c.bf16 %v240, %v239
        %v281 = vpack.c.bf16 %v242, %v241
        %v282 = vpack.c.bf16 %v244, %v243
        %v283 = vpack.c.bf16 %v246, %v245
        %v284 = vpack.c.bf16 %v248, %v247
        %v285 = vpack.c.bf16 %v250, %v249
        %v286 = vpack.c.bf16 %v252, %v251
        %v287 = vpack.c.bf16 %v254, %v253
        %v288 = vpack.c.bf16 %v256, %v255
        %v289 = vld [vmem:[%s1] sm:$0xf]
        %v290 = vld [vmem:[%s1 + $0x4] sm:$0xf]
        %v291 = vld [vmem:[%s1 + $0x8] sm:$0xf]
        %v292 = vld [vmem:[%s1 + $0xc] sm:$0xf]
        %s293 = scalar_lea.vmem %s1, 16
        %v294 = vld [vmem:[%s293] sm:$0xf]
        %v295 = vld [vmem:[%s293 + $0x4] sm:$0xf]
        %v296 = vld [vmem:[%s293 + $0x8] sm:$0xf]
        %v297 = vld [vmem:[%s293 + $0xc] sm:$0xf]
        %s298 = scalar_lea.vmem %s1, 32
        %v299 = vld [vmem:[%s298] sm:$0xf]
        %v300 = vld [vmem:[%s2] sm:$0xff]
        %v301 = vld [vmem:[%s2 + $0x8] sm:$0xff]
        %v302 = vld [vmem:[%s2 + $0x10] sm:$0xff]
        %v303 = vld [vmem:[%s2 + $0x18] sm:$0xff]
        %s304 = scalar_lea.vmem %s2, 32
        %v305 = vld [vmem:[%s304] sm:$0xff]
        %v306 = vld [vmem:[%s304 + $0x8] sm:$0xff]
        %v307 = vld [vmem:[%s304 + $0x10] sm:$0xff]
        %v308 = vld [vmem:[%s304 + $0x18] sm:$0xff]
        %s309 = scalar_lea.vmem %s2, 64
        %v310 = vld [vmem:[%s309] sm:$0xff]
        %312 = vset.pattern.permute.xlu0 0
        %313 = vperm.xlu0 %312, %v300
        %v314 = vpop.permute.xlu0 %313
        %317 = vset.pattern.permute.xlu0 0
        %318 = vperm.xlu0 %317, %v301
        %v319 = vpop.permute.xlu0 %318
        %322 = vset.pattern.permute.xlu0 0
        %323 = vperm.xlu0 %322, %v302
        %v324 = vpop.permute.xlu0 %323
        %327 = vset.pattern.permute.xlu0 0
        %328 = vperm.xlu0 %327, %v303
        %v329 = vpop.permute.xlu0 %328
        %v335 = vunpack.c.l.b16 %v289
        %v336 = vunpack.c.l.b16 %v290
        %v337 = vunpack.c.l.b16 %v291
        %v338 = vunpack.c.l.b16 %v292
        %v339 = vpack.c.b16 %v336, %v335
        %v340 = vpack.c.b16 %v338, %v337
        %vm341 = vcmask 261120
        %v343 = vsel %vm341, %v339, 0
        %v346 = vsel %vm341, %v340, 0
        %v349 = vsel %vm341, %v257, 0
        %v352 = vsel %vm341, %v258, 0
        %v355 = vsel %vm341, %v259, 0
        %v358 = vsel %vm341, %v260, 0
        %v361 = vsel %vm341, %v261, 0
        %v364 = vsel %vm341, %v262, 0
        %v367 = vsel %vm341, %v263, 0
        %v370 = vsel %vm341, %v264, 0
        %v373 = vsel %vm341, %v265, 0
        %v376 = vsel %vm341, %v266, 0
        %v379 = vsel %vm341, %v267, 0
        %v382 = vsel %vm341, %v268, 0
        %v385 = vsel %vm341, %v269, 0
        %v388 = vsel %vm341, %v270, 0
        %v391 = vsel %vm341, %v271, 0
        %v394 = vsel %vm341, %v272, 0
        %v397 = vsel %vm341, %v273, 0
        %v400 = vsel %vm341, %v274, 0
        %v403 = vsel %vm341, %v275, 0
        %v406 = vsel %vm341, %v276, 0
        %v409 = vsel %vm341, %v277, 0
        %v412 = vsel %vm341, %v278, 0
        %v415 = vsel %vm341, %v279, 0
        %v418 = vsel %vm341, %v280, 0
        %v421 = vsel %vm341, %v281, 0
        %v424 = vsel %vm341, %v282, 0
        %v427 = vsel %vm341, %v283, 0
        %v430 = vsel %vm341, %v284, 0
        %v433 = vsel %vm341, %v285, 0
        %v436 = vsel %vm341, %v286, 0
        %v439 = vsel %vm341, %v287, 0
        %v442 = vsel %vm341, %v288, 0
        %444 = vmatprep.subr.bf16.mxu0 0
        %445 = vmatpush1.bf16.xpose.msra.mxu0 %v349
        %446 = vmatprep.subr.bf16.mxu0 0
        %447 = vmatpush1.bf16.xpose.msra.mxu0 %v352
        %448 = vmatprep.subr.bf16.mxu0 0
        %449 = vmatpush1.bf16.xpose.msra.mxu0 %v355
        %450 = vmatprep.subr.bf16.mxu0 0
        %451 = vmatpush1.bf16.xpose.msra.mxu0 %v358
        %452 = vmatprep.subr.bf16.mxu0 0
        %453 = vmatpush1.bf16.xpose.msra.mxu0 %v361
        %454 = vmatprep.subr.bf16.mxu0 0
        %455 = vmatpush1.bf16.xpose.msra.mxu0 %v364
        %456 = vmatprep.subr.bf16.mxu0 0
        %457 = vmatpush1.bf16.xpose.msra.mxu0 %v367
        %458 = vmatprep.subr.bf16.mxu0 0
        %459 = vmatpush1.bf16.xpose.msra.mxu0 %v370
        %460 = vmatprep.subr.bf16.mxu0 0
        %461 = vmatpush1.bf16.xpose.msra.mxu0 %v373
        %462 = vmatprep.subr.bf16.mxu0 0
        %463 = vmatpush1.bf16.xpose.msra.mxu0 %v376
        %464 = vmatprep.subr.bf16.mxu0 0
        %465 = vmatpush1.bf16.xpose.msra.mxu0 %v379
        %466 = vmatprep.subr.bf16.mxu0 0
        %467 = vmatpush1.bf16.xpose.msra.mxu0 %v382
        %468 = vmatprep.subr.bf16.mxu0 0
        %469 = vmatpush1.bf16.xpose.msra.mxu0 %v385
        %470 = vmatprep.subr.bf16.mxu0 0
        %471 = vmatpush1.bf16.xpose.msra.mxu0 %v388
        %472 = vmatprep.subr.bf16.mxu0 0
        %473 = vmatpush1.bf16.xpose.msra.mxu0 %v391
        %474 = vmatprep.subr.bf16.mxu0 0
        %475 = vmatpush1.bf16.xpose.msra.mxu0 %v394
        %476 = vmatprep.mubr.bf16.mxu0 0
        %477 = vmatmul.mubr.bf16.gmra.mrb[0].mxu0 %v343
        %v478 = vpop.f32.mrb[0].mxu0
        %v479 = vadd.f32 %v314, %v478
        %v480 = vpop.f32.mrb[0].mxu0
        %v481 = vadd.f32 %v314, %v480
        %v482 = vpop.f32.mrb[0].mxu0
        %v483 = vadd.f32 %v319, %v482
        %v484 = vpop.f32.mrb[0].mxu0
        %v485 = vadd.f32 %v319, %v484
        %486 = vmatprep.mubr.bf16.mxu0 0
        %487 = vmatmul.mubr.bf16.gmra.mrb[0].mxu0 %v346
        %v488 = vpop.f32.mrb[0].mxu0
        %v489 = vadd.f32 %v324, %v488
        %v490 = vpop.f32.mrb[0].mxu0
        %v491 = vadd.f32 %v324, %v490
        %v492 = vpop.f32.mrb[0].mxu0
        %v493 = vadd.f32 %v329, %v492
        %v494 = vpop.f32.mrb[0].mxu0
        %v495 = vadd.f32 %v329, %v494
        %496 = vdwg.mxu0
        %497 = vmatprep.subr.bf16.mxu0 0
        %498 = vmatpush1.bf16.xpose.msra.mxu0 %v397
        %499 = vmatprep.subr.bf16.mxu0 0
        %500 = vmatpush1.bf16.xpose.msra.mxu0 %v400
        %501 = vmatprep.subr.bf16.mxu0 0
        %502 = vmatpush1.bf16.xpose.msra.mxu0 %v403
        %503 = vmatprep.subr.bf16.mxu0 0
        %504 = vmatpush1.bf16.xpose.msra.mxu0 %v406
        %505 = vmatprep.subr.bf16.mxu0 0
        %506 = vmatpush1.bf16.xpose.msra.mxu0 %v409
        %507 = vmatprep.subr.bf16.mxu0 0
        %508 = vmatpush1.bf16.xpose.msra.mxu0 %v412
        %509 = vmatprep.subr.bf16.mxu0 0
        %510 = vmatpush1.bf16.xpose.msra.mxu0 %v415
        %511 = vmatprep.subr.bf16.mxu0 0
        %512 = vmatpush1.bf16.xpose.msra.mxu0 %v418
        %513 = vmatprep.subr.bf16.mxu0 0
        %514 = vmatpush1.bf16.xpose.msra.mxu0 %v421
        %515 = vmatprep.subr.bf16.mxu0 0
        %516 = vmatpush1.bf16.xpose.msra.mxu0 %v424
        %517 = vmatprep.subr.bf16.mxu0 0
        %518 = vmatpush1.bf16.xpose.msra.mxu0 %v427
        %519 = vmatprep.subr.bf16.mxu0 0
        %520 = vmatpush1.bf16.xpose.msra.mxu0 %v430
        %521 = vmatprep.subr.bf16.mxu0 0
        %522 = vmatpush1.bf16.xpose.msra.mxu0 %v433
        %523 = vmatprep.subr.bf16.mxu0 0
        %524 = vmatpush1.bf16.xpose.msra.mxu0 %v436
        %525 = vmatprep.subr.bf16.mxu0 0
        %526 = vmatpush1.bf16.xpose.msra.mxu0 %v439
        %527 = vmatprep.subr.bf16.mxu0 0
        %528 = vmatpush1.bf16.xpose.msra.mxu0 %v442
        %529 = vmatprep.mubr.bf16.mxu0 0
        %530 = vmatmul.mubr.bf16.gmra.mrb[0].mxu0 %v343
        %v531 = vpop.f32.mrb[0].mxu0
        %v532 = vadd.f32 %v314, %v531
        %v533 = vpop.f32.mrb[0].mxu0
        %v534 = vadd.f32 %v314, %v533
        %v535 = vpop.f32.mrb[0].mxu0
        %v536 = vadd.f32 %v319, %v535
        %v537 = vpop.f32.mrb[0].mxu0
        %v538 = vadd.f32 %v319, %v537
        %539 = vmatprep.mubr.bf16.mxu0 0
        %540 = vmatmul.mubr.bf16.gmra.mrb[0].mxu0 %v346
        %v541 = vpop.f32.mrb[0].mxu0
        %v542 = vadd.f32 %v324, %v541
        %v543 = vpop.f32.mrb[0].mxu0
        %v544 = vadd.f32 %v324, %v543
        %v545 = vpop.f32.mrb[0].mxu0
        %v546 = vadd.f32 %v329, %v545
        %v547 = vpop.f32.mrb[0].mxu0
        %v548 = vadd.f32 %v329, %v547
        %549 = vdwg.mxu0
        %v550 = vmax.f32 %v479, 0.0
        %v551 = vmax.f32 %v481, 0.0
        %v552 = vmax.f32 %v532, 0.0
        %v553 = vmax.f32 %v534, 0.0
        %v554 = vmax.f32 %v483, 0.0
        %v555 = vmax.f32 %v485, 0.0
        %v556 = vmax.f32 %v536, 0.0
        %v557 = vmax.f32 %v538, 0.0
        %v558 = vmax.f32 %v489, 0.0
        %v559 = vmax.f32 %v491, 0.0
        %v560 = vmax.f32 %v542, 0.0
        %v561 = vmax.f32 %v544, 0.0
        %v562 = vmax.f32 %v493, 0.0
        %v563 = vmax.f32 %v495, 0.0
        %v564 = vmax.f32 %v546, 0.0
        %v565 = vmax.f32 %v548, 0.0
        %v566 = vpack.c.bf16 %v554, %v550
        %v567 = vpack.c.bf16 %v555, %v551
        %v568 = vpack.c.bf16 %v556, %v552
        %v569 = vpack.c.bf16 %v557, %v553
        %v570 = vpack.c.bf16 %v562, %v558
        %v571 = vpack.c.bf16 %v563, %v559
        %v572 = vpack.c.bf16 %v564, %v560
        %v573 = vpack.c.bf16 %v565, %v561
        %575 = vset.pattern.permute.xlu0 0
        %576 = vperm.xlu0 %575, %v305
        %v577 = vpop.permute.xlu0 %576
        %580 = vset.pattern.permute.xlu0 0
        %581 = vperm.xlu0 %580, %v306
        %v582 = vpop.permute.xlu0 %581
        %585 = vset.pattern.permute.xlu0 0
        %586 = vperm.xlu0 %585, %v307
        %v587 = vpop.permute.xlu0 %586
        %590 = vset.pattern.permute.xlu0 0
        %591 = vperm.xlu0 %590, %v308
        %v592 = vpop.permute.xlu0 %591
        %v598 = vunpack.c.l.b16 %v294
        %v599 = vunpack.c.l.b16 %v295
        %v600 = vunpack.c.l.b16 %v296
        %v601 = vunpack.c.l.b16 %v297
        %v602 = vpack.c.b16 %v599, %v598
        %v603 = vpack.c.b16 %v601, %v600
        %v605 = vsel %vm341, %v602, 0
        %v608 = vsel %vm341, %v603, 0
        %610 = vmatprep.subr.bf16.mxu0 %v567
        %611 = vmatpush1.bf16.msra.mxu0 %v566
        %612 = vmatprep.subr.bf16.mxu0 %v571
        %613 = vmatpush1.bf16.msra.mxu0 %v570
        %614 = vmatprep.subr.bf16.mxu0 0
        %615 = vmatpush1.bf16.msra.mxu0 0
        %616 = vmatprep.subr.bf16.mxu0 0
        %617 = vmatpush1.bf16.msra.mxu0 0
        %618 = vmatprep.subr.bf16.mxu0 0
        %619 = vmatpush1.bf16.msra.mxu0 0
        %620 = vmatprep.subr.bf16.mxu0 0
        %621 = vmatpush1.bf16.msra.mxu0 0
        %622 = vmatprep.subr.bf16.mxu0 0
        %623 = vmatpush1.bf16.msra.mxu0 0
        %624 = vmatprep.subr.bf16.mxu0 0
        %625 = vmatpush1.bf16.msra.mxu0 0
        %626 = vmatprep.subr.bf16.mxu0 0
        %627 = vmatpush1.bf16.msra.mxu0 0
        %628 = vmatprep.subr.bf16.mxu0 0
        %629 = vmatpush1.bf16.msra.mxu0 0
        %630 = vmatprep.subr.bf16.mxu0 0
        %631 = vmatpush1.bf16.msra.mxu0 0
        %632 = vmatprep.subr.bf16.mxu0 0
        %633 = vmatpush1.bf16.msra.mxu0 0
        %634 = vmatprep.subr.bf16.mxu0 0
        %635 = vmatpush1.bf16.msra.mxu0 0
        %636 = vmatprep.subr.bf16.mxu0 0
        %637 = vmatpush1.bf16.msra.mxu0 0
        %638 = vmatprep.subr.bf16.mxu0 0
        %639 = vmatpush1.bf16.msra.mxu0 0
        %640 = vmatprep.subr.bf16.mxu0 0
        %641 = vmatpush1.bf16.msra.mxu0 0
        %642 = vmatprep.mubr.bf16.mxu0 0
        %643 = vmatmul.mubr.bf16.gmra.mrb[0].mxu0 %v605
        %v644 = vpop.f32.mrb[0].mxu0
        %v645 = vadd.f32 %v577, %v644
        %v646 = vpop.f32.mrb[0].mxu0
        %v647 = vadd.f32 %v577, %v646
        %v648 = vpop.f32.mrb[0].mxu0
        %v649 = vadd.f32 %v582, %v648
        %v650 = vpop.f32.mrb[0].mxu0
        %v651 = vadd.f32 %v582, %v650
        %652 = vmatprep.mubr.bf16.mxu0 0
        %653 = vmatmul.mubr.bf16.gmra.mrb[0].mxu0 %v608
        %v654 = vpop.f32.mrb[0].mxu0
        %v655 = vadd.f32 %v587, %v654
        %v656 = vpop.f32.mrb[0].mxu0
        %v657 = vadd.f32 %v587, %v656
        %v658 = vpop.f32.mrb[0].mxu0
        %v659 = vadd.f32 %v592, %v658
        %v660 = vpop.f32.mrb[0].mxu0
        %v661 = vadd.f32 %v592, %v660
        %662 = vdwg.mxu0
        %663 = vmatprep.subr.bf16.mxu0 %v569
        %664 = vmatpush1.bf16.msra.mxu0 %v568
        %665 = vmatprep.subr.bf16.mxu0 %v573
        %666 = vmatpush1.bf16.msra.mxu0 %v572
        %667 = vmatprep.subr.bf16.mxu0 0
        %668 = vmatpush1.bf16.msra.mxu0 0
        %669 = vmatprep.subr.bf16.mxu0 0
        %670 = vmatpush1.bf16.msra.mxu0 0
        %671 = vmatprep.subr.bf16.mxu0 0
        %672 = vmatpush1.bf16.msra.mxu0 0
        %673 = vmatprep.subr.bf16.mxu0 0
        %674 = vmatpush1.bf16.msra.mxu0 0
        %675 = vmatprep.subr.bf16.mxu0 0
        %676 = vmatpush1.bf16.msra.mxu0 0
        %677 = vmatprep.subr.bf16.mxu0 0
        %678 = vmatpush1.bf16.msra.mxu0 0
        %679 = vmatprep.subr.bf16.mxu0 0
        %680 = vmatpush1.bf16.msra.mxu0 0
        %681 = vmatprep.subr.bf16.mxu0 0
        %682 = vmatpush1.bf16.msra.mxu0 0
        %683 = vmatprep.subr.bf16.mxu0 0
        %684 = vmatpush1.bf16.msra.mxu0 0
        %685 = vmatprep.subr.bf16.mxu0 0
        %686 = vmatpush1.bf16.msra.mxu0 0
        %687 = vmatprep.subr.bf16.mxu0 0
        %688 = vmatpush1.bf16.msra.mxu0 0
        %689 = vmatprep.subr.bf16.mxu0 0
        %690 = vmatpush1.bf16.msra.mxu0 0
        %691 = vmatprep.subr.bf16.mxu0 0
        %692 = vmatpush1.bf16.msra.mxu0 0
        %693 = vmatprep.subr.bf16.mxu0 0
        %694 = vmatpush1.bf16.msra.mxu0 0
        %695 = vmatprep.mubr.bf16.mxu0 0
        %696 = vmatmul.mubr.bf16.gmra.mrb[0].mxu0 %v605
        %v697 = vpop.f32.mrb[0].mxu0
        %v698 = vadd.f32 %v577, %v697
        %v699 = vpop.f32.mrb[0].mxu0
        %v700 = vadd.f32 %v577, %v699
        %v701 = vpop.f32.mrb[0].mxu0
        %v702 = vadd.f32 %v582, %v701
        %v703 = vpop.f32.mrb[0].mxu0
        %v704 = vadd.f32 %v582, %v703
        %705 = vmatprep.mubr.bf16.mxu0 0
        %706 = vmatmul.mubr.bf16.gmra.mrb[0].mxu0 %v608
        %v707 = vpop.f32.mrb[0].mxu0
        %v708 = vadd.f32 %v587, %v707
        %v709 = vpop.f32.mrb[0].mxu0
        %v710 = vadd.f32 %v587, %v709
        %v711 = vpop.f32.mrb[0].mxu0
        %v712 = vadd.f32 %v592, %v711
        %v713 = vpop.f32.mrb[0].mxu0
        %v714 = vadd.f32 %v592, %v713
        %715 = vdwg.mxu0
        %v716 = vmax.f32 %v645, 0.0
        %v717 = vmax.f32 %v647, 0.0
        %v718 = vmax.f32 %v698, 0.0
        %v719 = vmax.f32 %v700, 0.0
        %v720 = vmax.f32 %v649, 0.0
        %v721 = vmax.f32 %v651, 0.0
        %v722 = vmax.f32 %v702, 0.0
        %v723 = vmax.f32 %v704, 0.0
        %v724 = vmax.f32 %v655, 0.0
        %v725 = vmax.f32 %v657, 0.0
        %v726 = vmax.f32 %v708, 0.0
        %v727 = vmax.f32 %v710, 0.0
        %v728 = vmax.f32 %v659, 0.0
        %v729 = vmax.f32 %v661, 0.0
        %v730 = vmax.f32 %v712, 0.0
        %v731 = vmax.f32 %v714, 0.0
        %v732 = vpack.c.bf16 %v720, %v716
        %v733 = vpack.c.bf16 %v721, %v717
        %v734 = vpack.c.bf16 %v722, %v718
        %v735 = vpack.c.bf16 %v723, %v719
        %v736 = vpack.c.bf16 %v728, %v724
        %v737 = vpack.c.bf16 %v729, %v725
        %v738 = vpack.c.bf16 %v730, %v726
        %v739 = vpack.c.bf16 %v731, %v727
        %741 = vset.pattern.permute.xlu0 0
        %742 = vperm.xlu0 %741, %v310
        %v743 = vpop.permute.xlu0 %742
        %v746 = vsel %vm341, %v299, 0
        %748 = vmatprep.subr.bf16.mxu0 %v733
        %749 = vmatpush1.bf16.msra.mxu0 %v732
        %750 = vmatprep.subr.bf16.mxu0 %v737
        %751 = vmatpush1.bf16.msra.mxu0 %v736
        %752 = vmatprep.subr.bf16.mxu0 0
        %753 = vmatpush1.bf16.msra.mxu0 0
        %754 = vmatprep.subr.bf16.mxu0 0
        %755 = vmatpush1.bf16.msra.mxu0 0
        %756 = vmatprep.subr.bf16.mxu0 0
        %757 = vmatpush1.bf16.msra.mxu0 0
        %758 = vmatprep.subr.bf16.mxu0 0
        %759 = vmatpush1.bf16.msra.mxu0 0
        %760 = vmatprep.subr.bf16.mxu0 0
        %761 = vmatpush1.bf16.msra.mxu0 0
        %762 = vmatprep.subr.bf16.mxu0 0
        %763 = vmatpush1.bf16.msra.mxu0 0
        %764 = vmatprep.subr.bf16.mxu0 0
        %765 = vmatpush1.bf16.msra.mxu0 0
        %766 = vmatprep.subr.bf16.mxu0 0
        %767 = vmatpush1.bf16.msra.mxu0 0
        %768 = vmatprep.subr.bf16.mxu0 0
        %769 = vmatpush1.bf16.msra.mxu0 0
        %770 = vmatprep.subr.bf16.mxu0 0
        %771 = vmatpush1.bf16.msra.mxu0 0
        %772 = vmatprep.subr.bf16.mxu0 0
        %773 = vmatpush1.bf16.msra.mxu0 0
        %774 = vmatprep.subr.bf16.mxu0 0
        %775 = vmatpush1.bf16.msra.mxu0 0
        %776 = vmatprep.subr.bf16.mxu0 0
        %777 = vmatpush1.bf16.msra.mxu0 0
        %778 = vmatprep.subr.bf16.mxu0 0
        %779 = vmatpush1.bf16.msra.mxu0 0
        %780 = vmatprep.mubr.bf16.mxu0 0
        %781 = vmatmul.mubr.bf16.gmra.mrb[0].mxu0 %v746
        %v782 = vpop.f32.mrb[0].mxu0
        %v783 = vadd.f32 %v743, %v782
        %v784 = vpop.f32.mrb[0].mxu0
        %v785 = vadd.f32 %v743, %v784
        %v786 = vpop.f32.mrb[0].mxu0
        %v787 = vpop.f32.mrb[0].mxu0
        %788 = vdwg.mxu0
        %789 = vmatprep.subr.bf16.mxu0 %v735
        %790 = vmatpush1.bf16.msra.mxu0 %v734
        %791 = vmatprep.subr.bf16.mxu0 %v739
        %792 = vmatpush1.bf16.msra.mxu0 %v738
        %793 = vmatprep.subr.bf16.mxu0 0
        %794 = vmatpush1.bf16.msra.mxu0 0
        %795 = vmatprep.subr.bf16.mxu0 0
        %796 = vmatpush1.bf16.msra.mxu0 0
        %797 = vmatprep.subr.bf16.mxu0 0
        %798 = vmatpush1.bf16.msra.mxu0 0
        %799 = vmatprep.subr.bf16.mxu0 0
        %800 = vmatpush1.bf16.msra.mxu0 0
        %801 = vmatprep.subr.bf16.mxu0 0
        %802 = vmatpush1.bf16.msra.mxu0 0
        %803 = vmatprep.subr.bf16.mxu0 0
        %804 = vmatpush1.bf16.msra.mxu0 0
        %805 = vmatprep.subr.bf16.mxu0 0
        %806 = vmatpush1.bf16.msra.mxu0 0
        %807 = vmatprep.subr.bf16.mxu0 0
        %808 = vmatpush1.bf16.msra.mxu0 0
        %809 = vmatprep.subr.bf16.mxu0 0
        %810 = vmatpush1.bf16.msra.mxu0 0
        %811 = vmatprep.subr.bf16.mxu0 0
        %812 = vmatpush1.bf16.msra.mxu0 0
        %813 = vmatprep.subr.bf16.mxu0 0
        %814 = vmatpush1.bf16.msra.mxu0 0
        %815 = vmatprep.subr.bf16.mxu0 0
        %816 = vmatpush1.bf16.msra.mxu0 0
        %817 = vmatprep.subr.bf16.mxu0 0
        %818 = vmatpush1.bf16.msra.mxu0 0
        %819 = vmatprep.subr.bf16.mxu0 0
        %820 = vmatpush1.bf16.msra.mxu0 0
        %821 = vmatprep.mubr.bf16.mxu0 0
        %822 = vmatmul.mubr.bf16.gmra.mrb[0].mxu0 %v746
        %v823 = vpop.f32.mrb[0].mxu0
        %v824 = vadd.f32 %v743, %v823
        %v825 = vpop.f32.mrb[0].mxu0
        %v826 = vadd.f32 %v743, %v825
        %v827 = vpop.f32.mrb[0].mxu0
        %v828 = vpop.f32.mrb[0].mxu0
        %829 = vdwg.mxu0
        %v834 = vcombine.low %v783, %v785
        %v835 = vcombine.low %v824, %v826
        %v837 = vunpack.c.l.s4 1966171168
        %v838 = vunpack.c.0.s8 %v837
        %v839 = vlaneseq
        %v840 = vshrl.u32 %v839, 7
        %v841 = vsub.s32 %v838, %v840
        %v842 = vrot.slane %v834, %v841
        %v844 = vunpack.c.l.s4 1966171168
        %v845 = vunpack.c.0.s8 %v844
        %v846 = vlaneseq
        %v847 = vshrl.u32 %v846, 7
        %v848 = vsub.s32 %v845, %v847
        %v849 = vrot.slane %v835, %v848
        %v850 = vcombine.low %v842, %v849
        %v852 = vunpack.c.l.s4 1966171168
        %v853 = vunpack.c.0.s8 %v852
        %v854 = vlaneseq
        %v855 = vshrl.u32 %v854, 7
        %v856 = vsub.s32 %v853, %v855
        %v857 = vrot.slane %v850, %v856
        %v859 = vlaneseq
        %vm860 = vcmp.ge.s32.totalorder %v859, 0
        %vm861 = vcmp.lt.s32.totalorder %v859, 512
        %vm862 = vmand %vm860, %vm861
        %863 = vst.msk [vmem:[%s176] sm:$0xf] %vm862, %v857
        %s864 = sand.u32 %s93, 1
        %s865 = scalar_lea.sflag [#allocation3], %s864
        %s866 = sand.u32 %s93, 1
        %s867 = smul.addr %s866, 4
        %s868 = scalar_lea.vmem [#allocation2], %s867
        // Predicated region
        $region33: #{tpu_custom_call.1} parent=31 // pred_check
          %p869 = pneg %p103
        $region34: #{tpu_custom_call.1} parent=31 // pred_check_branch
          %871 = sbr.rel (%p869) target = $region36
        $region35: #{tpu_custom_call.1} parent=31 // pred_region
          %s872 = smul.u32 4, %s17
          %s874 = ssub.s32 64, 64
          %875 = vsyncadd %s865, %s874
          %s876 = smul.addr %s872, 16
          %s877 = scalar_lea.hbm %s3, %s876
          %s879 = sshll.u32 %s868, 4
          %s880 = int_to_ptr.vmem [resolvable:$true] %s879
          %882 = dma.vmem_to_hbm [thread:$0]  %s880, 64, %s877, %s865
        $region36: #{tpu_custom_call.1} parent=31 // pred_fallthru
          _
      $region32: #{tpu_custom_call.1} parent=5 // pred_fallthru
        _
      %p883 = scmp.le.s32.totalorder 2, %s12
      // Predicated region
      $region37: #{tpu_custom_call.1} parent=5 // pred_check
        %p884 = pneg %p883
      $region38: #{tpu_custom_call.1} parent=5 // pred_check_branch
        %886 = sbr.rel (%p884) target = $region40
      $region39: #{tpu_custom_call.1} parent=5 // pred_region
        %s887 = ssub.s32 %s12, 2
        // Predicated region
        $region41: #{tpu_custom_call.1} parent=39 // pred_check
          %p888 = pneg %p109
        $region42: #{tpu_custom_call.1} parent=39 // pred_check_branch
          %890 = sbr.rel (%p888) target = $region44
        $region43: #{tpu_custom_call.1} parent=39 // pred_region
          %s891 = sand.u32 %s94, 1
          %s892 = scalar_lea.sflag [#allocation3], %s891
          %s893 = sand.u32 %s94, 1
          %s894 = smul.addr %s893, 4
          %s895 = scalar_lea.vmem [#allocation2], %s894
          %896 = dma.done %s892, 64
        $region44: #{tpu_custom_call.1} parent=39 // pred_fallthru
          _
      $region40: #{tpu_custom_call.1} parent=5 // pred_fallthru
        _
    $region6: #{tpu_custom_call.1} parent=1 // loop_footer
      %s16 = sadd.s32 1, %s12
    $region7: #{tpu_custom_call.1} parent=1 // loop_footer_branch
      %11 = sbr.rel target = $region3
    $region8: #{tpu_custom_call.1} parent=1 // loop_exit
      _
    %897 = vsyncpa [#allocation3], 1
    %s898 = scalar_lea.sflag [#allocation3], 1
    %899 = vsyncpa %s898, 1

</llo_original>
